<compile_context>
chip_gen: v7x
topology: tpu7x:2x2x1
jax: 0.10.0
libtpu: 0.0.40
codegen_flags: <defaults>
</compile_context>

<pallas_src>
import jax
import jax.numpy as jnp
from jax.experimental import pallas as pl
from jax.experimental.pallas import tpu as pltpu

LANE = 128


def _round_up(n, m=LANE):
    return ((n + m - 1) // m) * m


def _pad2d(w, rows, cols):
    out = jnp.zeros((rows, cols), w.dtype)
    return out.at[: w.shape[0], : w.shape[1]].set(w)


# ----------------------------------------------------------------------------
# Kernel: whole forward pass on one batch tile.
# ----------------------------------------------------------------------------
def vae_kernel(x_ref, eps_ref,
               w12, b12,          # folded fc1·fc2
               w3, b3,            # fused [mu | sigma] head
               w45, b45,          # folded fc4·fc5
               w6, b6,
               xhat_ref, musig_ref):
    # ---- encode:  h = relu(fc2(fc1(x))) = relu(x @ W12 + b12) ----
    x = x_ref[...]
    h = jnp.dot(x, w12[...], preferred_element_type=jnp.float32) + b12[...]
    h = jnp.maximum(h, 0.0)

    # ---- fused mu/sigma head (single 256-lane matmul) ----
    ms = jnp.dot(h, w3[...], preferred_element_type=jnp.float32) + b3[...]
    lat_p = ms.shape[-1] // 2                 # 128-aligned split
    mu = ms[:, :lat_p]
    sigma = ms[:, lat_p:]

    # ---- reparameterize (PyTorch module uses sigma directly, not logvar) ----
    z = mu + sigma * eps_ref[...]

    # ---- decode:  sigmoid(fc6(relu(fc5(fc4(z))))) = sigmoid(relu(z@W45+b45) @ W6 + b6) ----
    d = jnp.dot(z, w45[...], preferred_element_type=jnp.float32) + b45[...]
    d = jnp.maximum(d, 0.0)
    logits = jnp.dot(d, w6[...], preferred_element_type=jnp.float32) + b6[...]
    xhat_ref[...] = jax.nn.sigmoid(logits)

    musig_ref[...] = ms


# ----------------------------------------------------------------------------
# One-time parameter preparation: fold fc1·fc2 / fc4·fc5, build the fused
# mu|sigma head, and zero-pad everything to 128-lane multiples.
# ----------------------------------------------------------------------------
def prepare_params(raw_params):
    (w1, b1, w2, b2, w3a, b3a, w3b, b3b, w4, b4, w5, b5, w6, b6) = raw_params
    input_dim, hidden_dim = w1.shape
    latent_dim = w3a.shape[1]

    inp_p = _round_up(input_dim)
    hid_p = _round_up(hidden_dim)
    lat_p = _round_up(latent_dim)

    # Algebraic fold (no nonlinearity between fc1/fc2 and fc4/fc5 in the spec).
    w12 = w1 @ w2
    b12 = b1 @ w2 + b2
    w45 = w4 @ w5
    b45 = b4 @ w5 + b5

    w12p, b12p = _pad2d(w12, inp_p, hid_p), _pad2d(b12, 1, hid_p)
    w45p, b45p = _pad2d(w45, lat_p, hid_p), _pad2d(b45, 1, hid_p)
    w6p, b6p = _pad2d(w6, hid_p, inp_p), _pad2d(b6, 1, inp_p)

    # Fused mu|sigma head: each head gets its own 128-lane slot; padded lanes
    # have zero weight columns and zero bias, so sigma's pad lanes are exactly 0.
    w3p = jnp.zeros((hid_p, 2 * lat_p), jnp.float32)
    w3p = w3p.at[:hidden_dim, :latent_dim].set(w3a)
    w3p = w3p.at[:hidden_dim, lat_p:lat_p + latent_dim].set(w3b)
    b3p = jnp.zeros((1, 2 * lat_p), jnp.float32)
    b3p = b3p.at[:, :latent_dim].set(b3a)
    b3p = b3p.at[:, lat_p:lat_p + latent_dim].set(b3b)

    padded = (w12p, b12p, w3p, b3p, w45p, b45p, w6p, b6p)
    dims = dict(input_dim=input_dim, hidden_dim=hidden_dim,
                latent_dim=latent_dim, inp_p=inp_p, hid_p=hid_p, lat_p=lat_p)
    return padded, dims


def _pick_bm(b_pad):
    """Batch tile (rows, multiple of 8).  >=2 grid steps for large batches so
    both v7x TensorCores get work; tiny batches stay single-step."""
    BM_CAP = 512
    if b_pad >= 2 * BM_CAP:
        return BM_CAP
    if b_pad >= 128:
        return _round_up((b_pad + 1) // 2, 8)
    return b_pad


# ----------------------------------------------------------------------------
# Forward wrapper (jit'd).  Expects pre-padded params; only pads x / eps rows
# and x lanes per call (unavoidable), and slices padding off the outputs.
# ----------------------------------------------------------------------------
def make_vae_forward(padded_params, dims):
    w12p, b12p, w3p, b3p, w45p, b45p, w6p, b6p = padded_params
    input_dim = dims["input_dim"]
    latent_dim = dims["latent_dim"]
    inp_p, lat_p = dims["inp_p"], dims["lat_p"]

    def full_spec(shape):
        return pl.BlockSpec(shape, lambda i: (0,) * len(shape))

    @jax.jit
    def forward(x, eps):
        B = x.shape[0]
        b_pad = _round_up(B, 8)
        bm = _pick_bm(b_pad)
        grid = pl.cdiv(b_pad, bm)
        b_full = grid * bm

        # Pad batch rows (inert) and x lanes; eps is already [B, lat_p].
        if x.shape == (b_full, inp_p):
            x_p = x
        else:
            x_p = jnp.zeros((b_full, inp_p), jnp.float32).at[:B, :x.shape[1]].set(x)
        if eps.shape == (b_full, lat_p):
            eps_p = eps
        else:
            eps_p = jnp.zeros((b_full, lat_p), jnp.float32).at[:B, :eps.shape[1]].set(eps)

        in_specs = [
            pl.BlockSpec((bm, inp_p), lambda i: (i, 0)),        # x
            pl.BlockSpec((bm, lat_p), lambda i: (i, 0)),        # eps
            full_spec(w12p.shape), full_spec(b12p.shape),
            full_spec(w3p.shape), full_spec(b3p.shape),
            full_spec(w45p.shape), full_spec(b45p.shape),
            full_spec(w6p.shape), full_spec(b6p.shape),
        ]
        out_specs = [
            pl.BlockSpec((bm, inp_p), lambda i: (i, 0)),        # x_hat (padded)
            pl.BlockSpec((bm, 2 * lat_p), lambda i: (i, 0)),    # [mu | sigma]
        ]
        out_shape = [
            jax.ShapeDtypeStruct((b_full, inp_p), jnp.float32),
            jax.ShapeDtypeStruct((b_full, 2 * lat_p), jnp.float32),
        ]

        fn = pl.pallas_call(
            vae_kernel,
            out_shape=out_shape,
            grid_spec=pltpu.PrefetchScalarGridSpec(
                num_scalar_prefetch=0,
                grid=(grid,),
                in_specs=in_specs,
                out_specs=out_specs,
            ),
            compiler_params=pltpu.CompilerParams(
                dimension_semantics=("parallel",)),
        )
        xhat_p, musig_p = fn(x_p, eps_p, w12p, b12p, w3p, b3p,
                             w45p, b45p, w6p, b6p)

        x_hat = xhat_p[:B, :input_dim]
        mu = musig_p[:B, :latent_dim]
        sigma = musig_p[:B, lat_p:lat_p + latent_dim]
        return x_hat, mu, sigma

    return forward


# ----------------------------------------------------------------------------
# Init + pure-JAX reference (mirrors the PyTorch module exactly, unfolded).
# ----------------------------------------------------------------------------
def init_linear(key, in_dim, out_dim):
    """Deterministic PyTorch-style init; weight stored as [in, out]."""
    kw, kb = jax.random.split(key)
    bound = 1.0 / jnp.sqrt(in_dim)
    w = jax.random.uniform(kw, (in_dim, out_dim), jnp.float32, -bound, bound)
    b = jax.random.uniform(kb, (1, out_dim), jnp.float32, -bound, bound)
    return w, b


def reference_forward(x, eps, raw_params):
    (w1, b1, w2, b2, w3a, b3a, w3b, b3b, w4, b4, w5, b5, w6, b6) = raw_params
    h = jnp.maximum((x @ w1 + b1) @ w2 + b2, 0.0)        # relu(fc2(fc1(x)))
    mu = h @ w3a + b3a
    sigma = h @ w3b + b3b
    z = mu + sigma * eps
    d = jnp.maximum((z @ w4 + b4) @ w5 + b5, 0.0)        # relu(fc5(fc4(z)))
    x_hat = jax.nn.sigmoid(d @ w6 + b6)
    return x_hat, mu, sigma


if __name__ == "__main__":
    # Small shapes consistent with the module.
    B, input_dim, hidden_dim, latent_dim = 16, 64, 32, 16

    key = jax.random.PRNGKey(0)
    keys = jax.random.split(key, 9)

    raw_params = (
        *init_linear(keys[0], input_dim, hidden_dim),    # fc1
        *init_linear(keys[1], hidden_dim, hidden_dim),   # fc2
        *init_linear(keys[2], hidden_dim, latent_dim),   # fc3a
        *init_linear(keys[3], hidden_dim, latent_dim),   # fc3b
        *init_linear(keys[4], latent_dim, hidden_dim),   # fc4
        *init_linear(keys[5], hidden_dim, hidden_dim),   # fc5
        *init_linear(keys[6], hidden_dim, input_dim),    # fc6
    )

    # One-time prep: fold, fuse and pad the parameters.
    padded_params, dims = prepare_params(raw_params)
    vae_forward = make_vae_forward(padded_params, dims)

    x = jax.random.normal(keys[7], (B, input_dim), jnp.float32)
    # torch.randn_like(sigma) equivalent, generated directly at the
    # lane-padded latent width (extra lanes multiply a zero sigma).
    lat_p = dims["lat_p"]
    eps = jax.random.normal(keys[8], (B, lat_p), jnp.float32)

    x_hat, mu, sigma = vae_forward(x, eps)
    jax.block_until_ready((x_hat, mu, sigma))

    # Sanity check against the unfolded pure-JAX reference.
    ref_x_hat, ref_mu, ref_sigma = reference_forward(
        x, eps[:, :latent_dim], raw_params)
    assert jnp.allclose(x_hat, ref_x_hat, atol=1e-4, rtol=1e-4)
    assert jnp.allclose(mu, ref_mu, atol=1e-4, rtol=1e-4)
    assert jnp.allclose(sigma, ref_sigma, atol=1e-4, rtol=1e-4)

    print("KERNEL_OK")
</pallas_src>

<mosaic_0001>
module attributes {stable_mosaic.version = 11 : i64} {
  func.func @vae_kernel(%arg0: i32, %arg1: memref<16x128xf32, #tpu.memory_space<vmem>>, %arg2: memref<16x128xf32, #tpu.memory_space<vmem>>, %arg3: memref<128x128xf32, #tpu.memory_space<vmem>>, %arg4: memref<1x128xf32, #tpu.memory_space<vmem>>, %arg5: memref<128x256xf32, #tpu.memory_space<vmem>>, %arg6: memref<1x256xf32, #tpu.memory_space<vmem>>, %arg7: memref<128x128xf32, #tpu.memory_space<vmem>>, %arg8: memref<1x128xf32, #tpu.memory_space<vmem>>, %arg9: memref<128x128xf32, #tpu.memory_space<vmem>>, %arg10: memref<1x128xf32, #tpu.memory_space<vmem>>, %arg11: memref<16x128xf32, #tpu.memory_space<vmem>>, %arg12: memref<16x256xf32, #tpu.memory_space<vmem>>) attributes {dimension_semantics = [#tpu.dimension_semantics<parallel>], iteration_bounds = array<i64: 1>, scalar_prefetch = 0 : i64, scratch_operands = 0 : i64, tpu.core_type = #tpu.core_type<tc>, window_params = [{transform_indices = @transform_0, window_bounds = array<i64: 16, 128>}, {transform_indices = @transform_1, window_bounds = array<i64: 16, 128>}, {pipeline_mode = #tpu.pipeline_mode<synchronous>, transform_indices = @transform_2, window_bounds = array<i64: 128, 128>}, {pipeline_mode = #tpu.pipeline_mode<synchronous>, transform_indices = @transform_3, window_bounds = array<i64: 1, 128>}, {pipeline_mode = #tpu.pipeline_mode<synchronous>, transform_indices = @transform_4, window_bounds = array<i64: 128, 256>}, {pipeline_mode = #tpu.pipeline_mode<synchronous>, transform_indices = @transform_5, window_bounds = array<i64: 1, 256>}, {pipeline_mode = #tpu.pipeline_mode<synchronous>, transform_indices = @transform_6, window_bounds = array<i64: 128, 128>}, {pipeline_mode = #tpu.pipeline_mode<synchronous>, transform_indices = @transform_7, window_bounds = array<i64: 1, 128>}, {pipeline_mode = #tpu.pipeline_mode<synchronous>, transform_indices = @transform_8, window_bounds = array<i64: 128, 128>}, {pipeline_mode = #tpu.pipeline_mode<synchronous>, transform_indices = @transform_9, window_bounds = array<i64: 1, 128>}, {transform_indices = @transform_10, window_bounds = array<i64: 16, 128>}, {transform_indices = @transform_11, window_bounds = array<i64: 16, 256>}]} {
    %c0 = arith.constant 0 : index
    %c0_0 = arith.constant 0 : index
    %0 = vector.load %arg1[%c0, %c0_0] : memref<16x128xf32, #tpu.memory_space<vmem>>, vector<16x128xf32>
    %c0_1 = arith.constant 0 : index
    %c0_2 = arith.constant 0 : index
    %1 = vector.load %arg3[%c0_1, %c0_2] : memref<128x128xf32, #tpu.memory_space<vmem>>, vector<128x128xf32>
    %cst = arith.constant dense<0.000000e+00> : vector<16x128xf32>
    %2 = tpu.matmul %0, %1, %cst {dimension_numbers = #tpu.dot_dimension_numbers<[1], [0], [0], [1], [0, 0, 1, 1], [], []>} : vector<16x128xf32>, vector<128x128xf32>, vector<16x128xf32> -> vector<16x128xf32>
    %c0_3 = arith.constant 0 : index
    %c0_4 = arith.constant 0 : index
    %3 = vector.load %arg4[%c0_3, %c0_4] : memref<1x128xf32, #tpu.memory_space<vmem>>, vector<1x128xf32>
    %4 = vector.broadcast %3 : vector<1x128xf32> to vector<16x128xf32>
    %5 = arith.addf %2, %4 : vector<16x128xf32>
    %cst_5 = arith.constant 0.000000e+00 : f32
    %6 = vector.broadcast %cst_5 : f32 to vector<16x128xf32>
    %7 = arith.maximumf %5, %6 : vector<16x128xf32>
    %c0_6 = arith.constant 0 : index
    %c0_7 = arith.constant 0 : index
    %8 = vector.load %arg5[%c0_6, %c0_7] : memref<128x256xf32, #tpu.memory_space<vmem>>, vector<128x256xf32>
    %cst_8 = arith.constant dense<0.000000e+00> : vector<16x256xf32>
    %9 = tpu.matmul %7, %8, %cst_8 {dimension_numbers = #tpu.dot_dimension_numbers<[1], [0], [0], [1], [0, 0, 1, 1], [], []>} : vector<16x128xf32>, vector<128x256xf32>, vector<16x256xf32> -> vector<16x256xf32>
    %c0_9 = arith.constant 0 : index
    %c0_10 = arith.constant 0 : index
    %10 = vector.load %arg6[%c0_9, %c0_10] : memref<1x256xf32, #tpu.memory_space<vmem>>, vector<1x256xf32>
    %11 = vector.broadcast %10 : vector<1x256xf32> to vector<16x256xf32>
    %12 = arith.addf %9, %11 : vector<16x256xf32>
    %13 = vector.extract_strided_slice %12 {offsets = [0, 0], sizes = [16, 128], strides = [1, 1]} : vector<16x256xf32> to vector<16x128xf32>
    %14 = vector.extract_strided_slice %12 {offsets = [0, 128], sizes = [16, 128], strides = [1, 1]} : vector<16x256xf32> to vector<16x128xf32>
    %c0_11 = arith.constant 0 : index
    %c0_12 = arith.constant 0 : index
    %15 = vector.load %arg2[%c0_11, %c0_12] : memref<16x128xf32, #tpu.memory_space<vmem>>, vector<16x128xf32>
    %16 = arith.mulf %14, %15 : vector<16x128xf32>
    %17 = arith.addf %13, %16 : vector<16x128xf32>
    %c0_13 = arith.constant 0 : index
    %c0_14 = arith.constant 0 : index
    %18 = vector.load %arg7[%c0_13, %c0_14] : memref<128x128xf32, #tpu.memory_space<vmem>>, vector<128x128xf32>
    %cst_15 = arith.constant dense<0.000000e+00> : vector<16x128xf32>
    %19 = tpu.matmul %17, %18, %cst_15 {dimension_numbers = #tpu.dot_dimension_numbers<[1], [0], [0], [1], [0, 0, 1, 1], [], []>} : vector<16x128xf32>, vector<128x128xf32>, vector<16x128xf32> -> vector<16x128xf32>
    %c0_16 = arith.constant 0 : index
    %c0_17 = arith.constant 0 : index
    %20 = vector.load %arg8[%c0_16, %c0_17] : memref<1x128xf32, #tpu.memory_space<vmem>>, vector<1x128xf32>
    %21 = vector.broadcast %20 : vector<1x128xf32> to vector<16x128xf32>
    %22 = arith.addf %19, %21 : vector<16x128xf32>
    %cst_18 = arith.constant 0.000000e+00 : f32
    %23 = vector.broadcast %cst_18 : f32 to vector<16x128xf32>
    %24 = arith.maximumf %22, %23 : vector<16x128xf32>
    %c0_19 = arith.constant 0 : index
    %c0_20 = arith.constant 0 : index
    %25 = vector.load %arg9[%c0_19, %c0_20] : memref<128x128xf32, #tpu.memory_space<vmem>>, vector<128x128xf32>
    %cst_21 = arith.constant dense<0.000000e+00> : vector<16x128xf32>
    %26 = tpu.matmul %24, %25, %cst_21 {dimension_numbers = #tpu.dot_dimension_numbers<[1], [0], [0], [1], [0, 0, 1, 1], [], []>} : vector<16x128xf32>, vector<128x128xf32>, vector<16x128xf32> -> vector<16x128xf32>
    %c0_22 = arith.constant 0 : index
    %c0_23 = arith.constant 0 : index
    %27 = vector.load %arg10[%c0_22, %c0_23] : memref<1x128xf32, #tpu.memory_space<vmem>>, vector<1x128xf32>
    %28 = vector.broadcast %27 : vector<1x128xf32> to vector<16x128xf32>
    %29 = arith.addf %26, %28 : vector<16x128xf32>
    %30 = arith.negf %29 : vector<16x128xf32>
    %31 = math.exp %30 : vector<16x128xf32>
    %cst_24 = arith.constant 1.000000e+00 : f32
    %32 = vector.broadcast %cst_24 : f32 to vector<16x128xf32>
    %33 = arith.addf %32, %31 : vector<16x128xf32>
    %34 = arith.divf %32, %33 : vector<16x128xf32>
    %c0_25 = arith.constant 0 : index
    %c0_26 = arith.constant 0 : index
    %35 = vector.load %arg11[%c0_25, %c0_26] : memref<16x128xf32, #tpu.memory_space<vmem>>, vector<16x128xf32>
    tpu.vector_store %arg11[%c0_25, %c0_26], %34 {strides = array<i32>} : memref<16x128xf32, #tpu.memory_space<vmem>>, vector<16x128xf32>,
    %c0_27 = arith.constant 0 : index
    %c0_28 = arith.constant 0 : index
    %36 = vector.load %arg12[%c0_27, %c0_28] : memref<16x256xf32, #tpu.memory_space<vmem>>, vector<16x256xf32>
    tpu.vector_store %arg12[%c0_27, %c0_28], %12 {strides = array<i32>} : memref<16x256xf32, #tpu.memory_space<vmem>>, vector<16x256xf32>,
    return
  }
  func.func @transform_0(%arg0: i32) -> (i32, i32) {
    %c0_i32 = arith.constant 0 : i32
    %c0_i32_0 = arith.constant 0 : i32
    return %arg0, %c0_i32 : i32, i32
  }
  func.func @transform_1(%arg0: i32) -> (i32, i32) {
    %c0_i32 = arith.constant 0 : i32
    %c0_i32_0 = arith.constant 0 : i32
    return %arg0, %c0_i32 : i32, i32
  }
  func.func @transform_2(%arg0: i32) -> (i32, i32) {
    %c0_i32 = arith.constant 0 : i32
    %c0_i32_0 = arith.constant 0 : i32
    %c0_i32_1 = arith.constant 0 : i32
    return %c0_i32, %c0_i32_0 : i32, i32
  }
  func.func @transform_3(%arg0: i32) -> (i32, i32) {
    %c0_i32 = arith.constant 0 : i32
    %c0_i32_0 = arith.constant 0 : i32
    %c0_i32_1 = arith.constant 0 : i32
    return %c0_i32, %c0_i32_0 : i32, i32
  }
  func.func @transform_4(%arg0: i32) -> (i32, i32) {
    %c0_i32 = arith.constant 0 : i32
    %c0_i32_0 = arith.constant 0 : i32
    %c0_i32_1 = arith.constant 0 : i32
    return %c0_i32, %c0_i32_0 : i32, i32
  }
  func.func @transform_5(%arg0: i32) -> (i32, i32) {
    %c0_i32 = arith.constant 0 : i32
    %c0_i32_0 = arith.constant 0 : i32
    %c0_i32_1 = arith.constant 0 : i32
    return %c0_i32, %c0_i32_0 : i32, i32
  }
  func.func @transform_6(%arg0: i32) -> (i32, i32) {
    %c0_i32 = arith.constant 0 : i32
    %c0_i32_0 = arith.constant 0 : i32
    %c0_i32_1 = arith.constant 0 : i32
    return %c0_i32, %c0_i32_0 : i32, i32
  }
  func.func @transform_7(%arg0: i32) -> (i32, i32) {
    %c0_i32 = arith.constant 0 : i32
    %c0_i32_0 = arith.constant 0 : i32
    %c0_i32_1 = arith.constant 0 : i32
    return %c0_i32, %c0_i32_0 : i32, i32
  }
  func.func @transform_8(%arg0: i32) -> (i32, i32) {
    %c0_i32 = arith.constant 0 : i32
    %c0_i32_0 = arith.constant 0 : i32
    %c0_i32_1 = arith.constant 0 : i32
    return %c0_i32, %c0_i32_0 : i32, i32
  }
  func.func @transform_9(%arg0: i32) -> (i32, i32) {
    %c0_i32 = arith.constant 0 : i32
    %c0_i32_0 = arith.constant 0 : i32
    %c0_i32_1 = arith.constant 0 : i32
    return %c0_i32, %c0_i32_0 : i32, i32
  }
  func.func @transform_10(%arg0: i32) -> (i32, i32) {
    %c0_i32 = arith.constant 0 : i32
    %c0_i32_0 = arith.constant 0 : i32
    return %arg0, %c0_i32 : i32, i32
  }
  func.func @transform_11(%arg0: i32) -> (i32, i32) {
    %c0_i32 = arith.constant 0 : i32
    %c0_i32_0 = arith.constant 0 : i32
    return %arg0, %c0_i32 : i32, i32
  }
}

</mosaic_0001>

<llo_original>
// kernel: forward.1
$region0: #{forward.1}
  #allocation0 [shape = 'u32[]', space=smem, size = 0x4, offset = 0x4, fixed_abs, tag = 'smem constant byte address 0x4 - core index']
  #allocation1 [shape = 'u32[144,128]{1,0:T(1,128)}', space=vmem, size = 0x12000, scoped, tag = 'internal scratch']
  %s0 = inlined_call_operand.vmem [shape: f32[16,128], index: 0, kind: input, shape index: {}]
  %s1 = inlined_call_operand.vmem [shape: f32[16,128], index: 1, kind: input, shape index: {}]
  %s2 = inlined_call_operand.hbm [shape: f32[128,128], index: 2, kind: input, shape index: {}]
  %s3 = inlined_call_operand.vmem [shape: f32[1,128], index: 3, kind: input, shape index: {}]
  %s4 = inlined_call_operand.hbm [shape: f32[128,256], index: 4, kind: input, shape index: {}]
  %s5 = inlined_call_operand.vmem [shape: f32[1,256], index: 5, kind: input, shape index: {}]
  %s6 = inlined_call_operand.hbm [shape: f32[128,128], index: 6, kind: input, shape index: {}]
  %s7 = inlined_call_operand.vmem [shape: f32[1,128], index: 7, kind: input, shape index: {}]
  %s8 = inlined_call_operand.hbm [shape: f32[128,128], index: 8, kind: input, shape index: {}]
  %s9 = inlined_call_operand.vmem [shape: f32[1,128], index: 9, kind: input, shape index: {}]
  %s10 = inlined_call_operand.hbm [shape: f32[16,128], index: 10, kind: output, shape index: {0}]
  %s11 = inlined_call_operand.vmem [shape: f32[16,256], index: 11, kind: output, shape index: {1}]
  %12 = xla_tuple %s10, %s11
  %s13 = sld [smem:[#allocation0]]
  $region74: #{forward.1} parent=0
    _
  %s15 = ssub.s32 1, %s13
  %s16 = scalar_select 0, %s15, %s13
  $region1: #{forward.1} parent=0
    #allocation2 [shape = 'u8[65536]{0}', space=vmem, size = 0x10000, scoped, tag = 'input window, operand 2, single buffered']
    #allocation3 [shape = 's32[1]{0}', space=sflag, size = 0x4, scoped, tag = 'scoped memory for forward.1']
    #allocation4 [shape = 's32[1]{0}', space=sflag, size = 0x4, scoped, tag = 'scoped memory for forward.1']
    #allocation5 [shape = 'u8[131072]{0}', space=vmem, size = 0x20000, scoped, tag = 'input window, operand 4, single buffered']
    #allocation6 [shape = 's32[1]{0}', space=sflag, size = 0x4, scoped, tag = 'scoped memory for forward.1']
    #allocation7 [shape = 'u8[65536]{0}', space=vmem, size = 0x10000, scoped, tag = 'input window, operand 6, single buffered']
    #allocation8 [shape = 'u8[65536]{0}', space=vmem, size = 0x10000, scoped, tag = 'input window, operand 8, single buffered']
    #allocation9 [shape = 's32[1]{0}', space=sflag, size = 0x4, scoped, tag = 'scoped memory for forward.1']
    #allocation10 [shape = 'u8[8192]{0}', space=vmem, size = 0x2000, scoped, tag = 'output window, operand 0, single buffered']
    %17 = vsyncpa [#allocation3], 0
    %18 = vsyncpa [#allocation6], 0
    %19 = vsyncpa [#allocation9], 0
    %20 = vsyncpa [#allocation4], 0
    // Predicated region
    $region2: #{forward.1} parent=1 // pred_check
      _
    $region3: #{forward.1} parent=1 // pred_check_branch
      %22 = sbr.rel (0) target = $region5
    $region4: #{forward.1} parent=1 // pred_region
      _
    $region5: #{forward.1} parent=1 // pred_fallthru
      _
    // Predicated region
    $region6: #{forward.1} parent=1 // pred_check
      _
    $region7: #{forward.1} parent=1 // pred_check_branch
      %24 = sbr.rel (0) target = $region9
    $region8: #{forward.1} parent=1 // pred_region
      _
    $region9: #{forward.1} parent=1 // pred_fallthru
      _
    // Predicated region
    $region10: #{forward.1} parent=1 // pred_check
      _
    $region11: #{forward.1} parent=1 // pred_check_branch
      %26 = sbr.rel (0) target = $region13
    $region12: #{forward.1} parent=1 // pred_region
      %s28 = ssub.s32 2048, 2048
      %29 = vsyncadd [#allocation3], %s28
      %s30 = sshll.u32 [#allocation2], 4
      %s31 = int_to_ptr.vmem [resolvable:$true] %s30
      %36 = dma.hbm_to_vmem [thread:$0]  %s2, 2048, %s31, [#allocation3], 128, 128, 8
    $region13: #{forward.1} parent=1 // pred_fallthru
      _
    // Predicated region
    $region14: #{forward.1} parent=1 // pred_check
      _
    $region15: #{forward.1} parent=1 // pred_check_branch
      %38 = sbr.rel (0) target = $region17
    $region16: #{forward.1} parent=1 // pred_region
      _
    $region17: #{forward.1} parent=1 // pred_fallthru
      _
    // Predicated region
    $region18: #{forward.1} parent=1 // pred_check
      _
    $region19: #{forward.1} parent=1 // pred_check_branch
      %40 = sbr.rel (0) target = $region21
    $region20: #{forward.1} parent=1 // pred_region
      %s42 = ssub.s32 4096, 4096
      %43 = vsyncadd [#allocation6], %s42
      %s44 = sshll.u32 [#allocation5], 4
      %s45 = int_to_ptr.vmem [resolvable:$true] %s44
      %50 = dma.hbm_to_vmem [thread:$0]  %s4, 4096, %s45, [#allocation6], 256, 256, 16
    $region21: #{forward.1} parent=1 // pred_fallthru
      _
    // Predicated region
    $region22: #{forward.1} parent=1 // pred_check
      _
    $region23: #{forward.1} parent=1 // pred_check_branch
      %52 = sbr.rel (0) target = $region25
    $region24: #{forward.1} parent=1 // pred_region
      _
    $region25: #{forward.1} parent=1 // pred_fallthru
      _
    // Predicated region
    $region26: #{forward.1} parent=1 // pred_check
      _
    $region27: #{forward.1} parent=1 // pred_check_branch
      %54 = sbr.rel (0) target = $region29
    $region28: #{forward.1} parent=1 // pred_region
      %s56 = ssub.s32 2048, 2048
      %57 = vsyncadd [#allocation6], %s56
      %s58 = sshll.u32 [#allocation7], 4
      %s59 = int_to_ptr.vmem [resolvable:$true] %s58
      %64 = dma.hbm_to_vmem [thread:$0]  %s6, 2048, %s59, [#allocation6], 128, 128, 8
    $region29: #{forward.1} parent=1 // pred_fallthru
      _
    // Predicated region
    $region30: #{forward.1} parent=1 // pred_check
      _
    $region31: #{forward.1} parent=1 // pred_check_branch
      %66 = sbr.rel (0) target = $region33
    $region32: #{forward.1} parent=1 // pred_region
      _
    $region33: #{forward.1} parent=1 // pred_fallthru
      _
    // Predicated region
    $region34: #{forward.1} parent=1 // pred_check
      _
    $region35: #{forward.1} parent=1 // pred_check_branch
      %68 = sbr.rel (0) target = $region37
    $region36: #{forward.1} parent=1 // pred_region
      %s70 = ssub.s32 2048, 2048
      %71 = vsyncadd [#allocation9], %s70
      %s72 = sshll.u32 [#allocation8], 4
      %s73 = int_to_ptr.vmem [resolvable:$true] %s72
      %78 = dma.hbm_to_vmem [thread:$0]  %s8, 2048, %s73, [#allocation9], 128, 128, 8
    $region37: #{forward.1} parent=1 // pred_fallthru
      _
    // Predicated region
    $region38: #{forward.1} parent=1 // pred_check
      _
    $region39: #{forward.1} parent=1 // pred_check_branch
      %80 = sbr.rel (0) target = $region41
    $region40: #{forward.1} parent=1 // pred_region
      _
    $region41: #{forward.1} parent=1 // pred_fallthru
      _
    // Predicated region
    $region42: #{forward.1} parent=1 // pred_check
      _
    $region43: #{forward.1} parent=1 // pred_check_branch
      %82 = sbr.rel (0) target = $region45
    $region44: #{forward.1} parent=1 // pred_region
      %83 = dma.done [#allocation3], 2048
    $region45: #{forward.1} parent=1 // pred_fallthru
      _
    // Predicated region
    $region46: #{forward.1} parent=1 // pred_check
      _
    $region47: #{forward.1} parent=1 // pred_check_branch
      %85 = sbr.rel (0) target = $region49
    $region48: #{forward.1} parent=1 // pred_region
      %86 = dma.done [#allocation6], 4096
    $region49: #{forward.1} parent=1 // pred_fallthru
      _
    // Predicated region
    $region50: #{forward.1} parent=1 // pred_check
      _
    $region51: #{forward.1} parent=1 // pred_check_branch
      %88 = sbr.rel (0) target = $region53
    $region52: #{forward.1} parent=1 // pred_region
      %89 = dma.done [#allocation6], 2048
    $region53: #{forward.1} parent=1 // pred_fallthru
      _
    // Predicated region
    $region54: #{forward.1} parent=1 // pred_check
      _
    $region55: #{forward.1} parent=1 // pred_check_branch
      %91 = sbr.rel (0) target = $region57
    $region56: #{forward.1} parent=1 // pred_region
      %92 = dma.done [#allocation9], 2048
    $region57: #{forward.1} parent=1 // pred_fallthru
      _
    %v93 = vld [vmem:[%s0] sm:$0xff]
    %v94 = vld [vmem:[%s0 + $0x8] sm:$0xff]
    %v95 = vld [vmem:[#allocation2] sm:$0xff]
    %v96 = vld [vmem:[#allocation2 + $0x8] sm:$0xff]
    %v97 = vld [vmem:[#allocation2 + $0x10] sm:$0xff]
    %v98 = vld [vmem:[#allocation2 + $0x18] sm:$0xff]
    %v99 = vld [vmem:[#allocation2 + $0x20] sm:$0xff]
    %v100 = vld [vmem:[#allocation2 + $0x28] sm:$0xff]
    %v101 = vld [vmem:[#allocation2 + $0x30] sm:$0xff]
    %v102 = vld [vmem:[#allocation2 + $0x38] sm:$0xff]
    %v103 = vld [vmem:[#allocation2 + $0x40] sm:$0xff]
    %v104 = vld [vmem:[#allocation2 + $0x48] sm:$0xff]
    %v105 = vld [vmem:[#allocation2 + $0x50] sm:$0xff]
    %v106 = vld [vmem:[#allocation2 + $0x58] sm:$0xff]
    %v107 = vld [vmem:[#allocation2 + $0x60] sm:$0xff]
    %v108 = vld [vmem:[#allocation2 + $0x68] sm:$0xff]
    %v109 = vld [vmem:[#allocation2 + $0x70] sm:$0xff]
    %v110 = vld [vmem:[#allocation2 + $0x78] sm:$0xff]
    %v111 = vld [vmem:[%s3] sm:$0x1]
    %v113 = vlaneseq
    %v114 = vshrl.u32 %v113, 7
    %v115 = vsub.s32 0, %v114
    %v116 = vrot.slane %v111, %v115
    %118 = vmatprep.subr.mxu0 0.0
    %119 = vmatpush1.msra.mxu0 %v95
    %120 = vmatprep.subr.mxu0 0.0
    %121 = vmatpush1.msra.mxu0 %v96
    %122 = vmatprep.subr.mxu0 0.0
    %123 = vmatpush1.msra.mxu0 %v97
    %124 = vmatprep.subr.mxu0 0.0
    %125 = vmatpush1.msra.mxu0 %v98
    %126 = vmatprep.subr.mxu0 0.0
    %127 = vmatpush1.msra.mxu0 %v99
    %128 = vmatprep.subr.mxu0 0.0
    %129 = vmatpush1.msra.mxu0 %v100
    %130 = vmatprep.subr.mxu0 0.0
    %131 = vmatpush1.msra.mxu0 %v101
    %132 = vmatprep.subr.mxu0 0.0
    %133 = vmatpush1.msra.mxu0 %v102
    %134 = vmatprep.subr.mxu0 0.0
    %135 = vmatpush1.msra.mxu0 %v103
    %136 = vmatprep.subr.mxu0 0.0
    %137 = vmatpush1.msra.mxu0 %v104
    %138 = vmatprep.subr.mxu0 0.0
    %139 = vmatpush1.msra.mxu0 %v105
    %140 = vmatprep.subr.mxu0 0.0
    %141 = vmatpush1.msra.mxu0 %v106
    %142 = vmatprep.subr.mxu0 0.0
    %143 = vmatpush1.msra.mxu0 %v107
    %144 = vmatprep.subr.mxu0 0.0
    %145 = vmatpush1.msra.mxu0 %v108
    %146 = vmatprep.subr.mxu0 0.0
    %147 = vmatpush1.msra.mxu0 %v109
    %148 = vmatprep.subr.mxu0 0.0
    %149 = vmatpush1.msra.mxu0 %v110
    %150 = vmatprep.subr.mxu0 0.0
    %151 = vmatpush1.msra.mxu0 0.0
    %152 = vmatprep.subr.mxu0 0.0
    %153 = vmatpush1.msra.mxu0 0.0
    %154 = vmatprep.subr.mxu0 0.0
    %155 = vmatpush1.msra.mxu0 0.0
    %156 = vmatprep.subr.mxu0 0.0
    %157 = vmatpush1.msra.mxu0 0.0
    %158 = vmatprep.subr.mxu0 0.0
    %159 = vmatpush1.msra.mxu0 0.0
    %160 = vmatprep.subr.mxu0 0.0
    %161 = vmatpush1.msra.mxu0 0.0
    %162 = vmatprep.subr.mxu0 0.0
    %163 = vmatpush1.msra.mxu0 0.0
    %164 = vmatprep.subr.mxu0 0.0
    %165 = vmatpush1.msra.mxu0 0.0
    %166 = vmatprep.subr.mxu0 0.0
    %167 = vmatpush1.msra.mxu0 0.0
    %168 = vmatprep.subr.mxu0 0.0
    %169 = vmatpush1.msra.mxu0 0.0
    %170 = vmatprep.subr.mxu0 0.0
    %171 = vmatpush1.msra.mxu0 0.0
    %172 = vmatprep.subr.mxu0 0.0
    %173 = vmatpush1.msra.mxu0 0.0
    %174 = vmatprep.subr.mxu0 0.0
    %175 = vmatpush1.msra.mxu0 0.0
    %176 = vmatprep.subr.mxu0 0.0
    %177 = vmatpush1.msra.mxu0 0.0
    %178 = vmatprep.subr.mxu0 0.0
    %179 = vmatpush1.msra.mxu0 0.0
    %180 = vmatprep.subr.mxu0 0.0
    %181 = vmatpush1.msra.mxu0 0.0
    %182 = vmatprep.mubr.f32.mxu0 0.0
    %183 = vmatmul.mubr.f32.gmra.mrb[0].mxu0 %v93
    %v184 = vpop.f32.mrb[0].mxu0
    %v185 = vadd.f32 %v116, %v184
    %v186 = vpop.f32.mrb[0].mxu0
    %187 = vmatprep.mubr.f32.mxu0 0.0
    %188 = vmatmul.mubr.f32.gmra.mrb[0].mxu0 %v94
    %v189 = vpop.f32.mrb[0].mxu0
    %v190 = vadd.f32 %v116, %v189
    %v191 = vpop.f32.mrb[0].mxu0
    %192 = vdwg.mxu0
    %v193 = vmax.f32 %v185, 0.0
    %v194 = vmax.f32 %v190, 0.0
    %v195 = vld [vmem:[#allocation5] sm:$0xff]
    %v196 = vld [vmem:[#allocation5 + $0x8] sm:$0xff]
    %v197 = vld [vmem:[#allocation5 + $0x10] sm:$0xff]
    %v198 = vld [vmem:[#allocation5 + $0x18] sm:$0xff]
    %v199 = vld [vmem:[#allocation5 + $0x20] sm:$0xff]
    %v200 = vld [vmem:[#allocation5 + $0x28] sm:$0xff]
    %v201 = vld [vmem:[#allocation5 + $0x30] sm:$0xff]
    %v202 = vld [vmem:[#allocation5 + $0x38] sm:$0xff]
    %v203 = vld [vmem:[#allocation5 + $0x40] sm:$0xff]
    %v204 = vld [vmem:[#allocation5 + $0x48] sm:$0xff]
    %v205 = vld [vmem:[#allocation5 + $0x50] sm:$0xff]
    %v206 = vld [vmem:[#allocation5 + $0x58] sm:$0xff]
    %v207 = vld [vmem:[#allocation5 + $0x60] sm:$0xff]
    %v208 = vld [vmem:[#allocation5 + $0x68] sm:$0xff]
    %v209 = vld [vmem:[#allocation5 + $0x70] sm:$0xff]
    %v210 = vld [vmem:[#allocation5 + $0x78] sm:$0xff]
    %v211 = vld [vmem:[#allocation5 + $0x80] sm:$0xff]
    %v212 = vld [vmem:[#allocation5 + $0x88] sm:$0xff]
    %v213 = vld [vmem:[#allocation5 + $0x90] sm:$0xff]
    %v214 = vld [vmem:[#allocation5 + $0x98] sm:$0xff]
    %v215 = vld [vmem:[#allocation5 + $0xa0] sm:$0xff]
    %v216 = vld [vmem:[#allocation5 + $0xa8] sm:$0xff]
    %v217 = vld [vmem:[#allocation5 + $0xb0] sm:$0xff]
    %v218 = vld [vmem:[#allocation5 + $0xb8] sm:$0xff]
    %v219 = vld [vmem:[#allocation5 + $0xc0] sm:$0xff]
    %v220 = vld [vmem:[#allocation5 + $0xc8] sm:$0xff]
    %v221 = vld [vmem:[#allocation5 + $0xd0] sm:$0xff]
    %v222 = vld [vmem:[#allocation5 + $0xd8] sm:$0xff]
    %v223 = vld [vmem:[#allocation5 + $0xe0] sm:$0xff]
    %v224 = vld [vmem:[#allocation5 + $0xe8] sm:$0xff]
    %v225 = vld [vmem:[#allocation5 + $0xf0] sm:$0xff]
    %v226 = vld [vmem:[#allocation5 + $0xf8] sm:$0xff]
    %v227 = vld [vmem:[%s5] sm:$0x3]
    %v229 = vlaneseq
    %v230 = vshrl.u32 %v229, 7
    %v231 = vsub.s32 0, %v230
    %v232 = vrot.slane %v227, %v231
    %v233 = vlaneseq
    %v234 = vshrl.u32 %v233, 7
    %v235 = vsub.s32 1, %v234
    %v236 = vrot.slane %v227, %v235
    %239 = vmatprep.subr.mxu0 %v196
    %240 = vmatpush1.msra.mxu0 %v195
    %241 = vmatprep.subr.mxu0 %v198
    %242 = vmatpush1.msra.mxu0 %v197
    %243 = vmatprep.subr.mxu0 %v200
    %244 = vmatpush1.msra.mxu0 %v199
    %245 = vmatprep.subr.mxu0 %v202
    %246 = vmatpush1.msra.mxu0 %v201
    %247 = vmatprep.subr.mxu0 %v204
    %248 = vmatpush1.msra.mxu0 %v203
    %249 = vmatprep.subr.mxu0 %v206
    %250 = vmatpush1.msra.mxu0 %v205
    %251 = vmatprep.subr.mxu0 %v208
    %252 = vmatpush1.msra.mxu0 %v207
    %253 = vmatprep.subr.mxu0 %v210
    %254 = vmatpush1.msra.mxu0 %v209
    %255 = vmatprep.subr.mxu0 %v212
    %256 = vmatpush1.msra.mxu0 %v211
    %257 = vmatprep.subr.mxu0 %v214
    %258 = vmatpush1.msra.mxu0 %v213
    %259 = vmatprep.subr.mxu0 %v216
    %260 = vmatpush1.msra.mxu0 %v215
    %261 = vmatprep.subr.mxu0 %v218
    %262 = vmatpush1.msra.mxu0 %v217
    %263 = vmatprep.subr.mxu0 %v220
    %264 = vmatpush1.msra.mxu0 %v219
    %265 = vmatprep.subr.mxu0 %v222
    %266 = vmatpush1.msra.mxu0 %v221
    %267 = vmatprep.subr.mxu0 %v224
    %268 = vmatpush1.msra.mxu0 %v223
    %269 = vmatprep.subr.mxu0 %v226
    %270 = vmatpush1.msra.mxu0 %v225
    %271 = vmatprep.subr.mxu0 0.0
    %272 = vmatpush1.msra.mxu0 0.0
    %273 = vmatprep.subr.mxu0 0.0
    %274 = vmatpush1.msra.mxu0 0.0
    %275 = vmatprep.subr.mxu0 0.0
    %276 = vmatpush1.msra.mxu0 0.0
    %277 = vmatprep.subr.mxu0 0.0
    %278 = vmatpush1.msra.mxu0 0.0
    %279 = vmatprep.subr.mxu0 0.0
    %280 = vmatpush1.msra.mxu0 0.0
    %281 = vmatprep.subr.mxu0 0.0
    %282 = vmatpush1.msra.mxu0 0.0
    %283 = vmatprep.subr.mxu0 0.0
    %284 = vmatpush1.msra.mxu0 0.0
    %285 = vmatprep.subr.mxu0 0.0
    %286 = vmatpush1.msra.mxu0 0.0
    %287 = vmatprep.subr.mxu0 0.0
    %288 = vmatpush1.msra.mxu0 0.0
    %289 = vmatprep.subr.mxu0 0.0
    %290 = vmatpush1.msra.mxu0 0.0
    %291 = vmatprep.subr.mxu0 0.0
    %292 = vmatpush1.msra.mxu0 0.0
    %293 = vmatprep.subr.mxu0 0.0
    %294 = vmatpush1.msra.mxu0 0.0
    %295 = vmatprep.subr.mxu0 0.0
    %296 = vmatpush1.msra.mxu0 0.0
    %297 = vmatprep.subr.mxu0 0.0
    %298 = vmatpush1.msra.mxu0 0.0
    %299 = vmatprep.subr.mxu0 0.0
    %300 = vmatpush1.msra.mxu0 0.0
    %301 = vmatprep.subr.mxu0 0.0
    %302 = vmatpush1.msra.mxu0 0.0
    %303 = vmatprep.mubr.f32.mxu0 0.0
    %304 = vmatmul.mubr.f32.gmra.mrb[0].mxu0 %v193
    %v305 = vpop.f32.mrb[0].mxu0
    %v306 = vadd.f32 %v232, %v305
    %v307 = vpop.f32.mrb[0].mxu0
    %v308 = vadd.f32 %v236, %v307
    %309 = vmatprep.mubr.f32.mxu0 0.0
    %310 = vmatmul.mubr.f32.gmra.mrb[0].mxu0 %v194
    %v311 = vpop.f32.mrb[0].mxu0
    %v312 = vadd.f32 %v232, %v311
    %v313 = vpop.f32.mrb[0].mxu0
    %v314 = vadd.f32 %v236, %v313
    %315 = vdwg.mxu0
    %v316 = vld [vmem:[%s1] sm:$0xff]
    %v317 = vld [vmem:[%s1 + $0x8] sm:$0xff]
    %v318 = vmul.f32 %v308, %v316
    %v319 = vmul.f32 %v314, %v317
    %v320 = vadd.f32 %v306, %v318
    %v321 = vadd.f32 %v312, %v319
    %v322 = vld [vmem:[#allocation7] sm:$0xff]
    %v323 = vld [vmem:[#allocation7 + $0x8] sm:$0xff]
    %v324 = vld [vmem:[#allocation7 + $0x10] sm:$0xff]
    %v325 = vld [vmem:[#allocation7 + $0x18] sm:$0xff]
    %v326 = vld [vmem:[#allocation7 + $0x20] sm:$0xff]
    %v327 = vld [vmem:[#allocation7 + $0x28] sm:$0xff]
    %v328 = vld [vmem:[#allocation7 + $0x30] sm:$0xff]
    %v329 = vld [vmem:[#allocation7 + $0x38] sm:$0xff]
    %v330 = vld [vmem:[#allocation7 + $0x40] sm:$0xff]
    %v331 = vld [vmem:[#allocation7 + $0x48] sm:$0xff]
    %v332 = vld [vmem:[#allocation7 + $0x50] sm:$0xff]
    %v333 = vld [vmem:[#allocation7 + $0x58] sm:$0xff]
    %v334 = vld [vmem:[#allocation7 + $0x60] sm:$0xff]
    %v335 = vld [vmem:[#allocation7 + $0x68] sm:$0xff]
    %v336 = vld [vmem:[#allocation7 + $0x70] sm:$0xff]
    %v337 = vld [vmem:[#allocation7 + $0x78] sm:$0xff]
    %v338 = vld [vmem:[%s7] sm:$0x1]
    %v340 = vlaneseq
    %v341 = vshrl.u32 %v340, 7
    %v342 = vsub.s32 0, %v341
    %v343 = vrot.slane %v338, %v342
    %345 = vmatprep.subr.mxu0 0.0
    %346 = vmatpush1.msra.mxu0 %v322
    %347 = vmatprep.subr.mxu0 0.0
    %348 = vmatpush1.msra.mxu0 %v323
    %349 = vmatprep.subr.mxu0 0.0
    %350 = vmatpush1.msra.mxu0 %v324
    %351 = vmatprep.subr.mxu0 0.0
    %352 = vmatpush1.msra.mxu0 %v325
    %353 = vmatprep.subr.mxu0 0.0
    %354 = vmatpush1.msra.mxu0 %v326
    %355 = vmatprep.subr.mxu0 0.0
    %356 = vmatpush1.msra.mxu0 %v327
    %357 = vmatprep.subr.mxu0 0.0
    %358 = vmatpush1.msra.mxu0 %v328
    %359 = vmatprep.subr.mxu0 0.0
    %360 = vmatpush1.msra.mxu0 %v329
    %361 = vmatprep.subr.mxu0 0.0
    %362 = vmatpush1.msra.mxu0 %v330
    %363 = vmatprep.subr.mxu0 0.0
    %364 = vmatpush1.msra.mxu0 %v331
    %365 = vmatprep.subr.mxu0 0.0
    %366 = vmatpush1.msra.mxu0 %v332
    %367 = vmatprep.subr.mxu0 0.0
    %368 = vmatpush1.msra.mxu0 %v333
    %369 = vmatprep.subr.mxu0 0.0
    %370 = vmatpush1.msra.mxu0 %v334
    %371 = vmatprep.subr.mxu0 0.0
    %372 = vmatpush1.msra.mxu0 %v335
    %373 = vmatprep.subr.mxu0 0.0
    %374 = vmatpush1.msra.mxu0 %v336
    %375 = vmatprep.subr.mxu0 0.0
    %376 = vmatpush1.msra.mxu0 %v337
    %377 = vmatprep.subr.mxu0 0.0
    %378 = vmatpush1.msra.mxu0 0.0
    %379 = vmatprep.subr.mxu0 0.0
    %380 = vmatpush1.msra.mxu0 0.0
    %381 = vmatprep.subr.mxu0 0.0
    %382 = vmatpush1.msra.mxu0 0.0
    %383 = vmatprep.subr.mxu0 0.0
    %384 = vmatpush1.msra.mxu0 0.0
    %385 = vmatprep.subr.mxu0 0.0
    %386 = vmatpush1.msra.mxu0 0.0
    %387 = vmatprep.subr.mxu0 0.0
    %388 = vmatpush1.msra.mxu0 0.0
    %389 = vmatprep.subr.mxu0 0.0
    %390 = vmatpush1.msra.mxu0 0.0
    %391 = vmatprep.subr.mxu0 0.0
    %392 = vmatpush1.msra.mxu0 0.0
    %393 = vmatprep.subr.mxu0 0.0
    %394 = vmatpush1.msra.mxu0 0.0
    %395 = vmatprep.subr.mxu0 0.0
    %396 = vmatpush1.msra.mxu0 0.0
    %397 = vmatprep.subr.mxu0 0.0
    %398 = vmatpush1.msra.mxu0 0.0
    %399 = vmatprep.subr.mxu0 0.0
    %400 = vmatpush1.msra.mxu0 0.0
    %401 = vmatprep.subr.mxu0 0.0
    %402 = vmatpush1.msra.mxu0 0.0
    %403 = vmatprep.subr.mxu0 0.0
    %404 = vmatpush1.msra.mxu0 0.0
    %405 = vmatprep.subr.mxu0 0.0
    %406 = vmatpush1.msra.mxu0 0.0
    %407 = vmatprep.subr.mxu0 0.0
    %408 = vmatpush1.msra.mxu0 0.0
    %409 = vmatprep.mubr.f32.mxu0 0.0
    %410 = vmatmul.mubr.f32.gmra.mrb[0].mxu0 %v320
    %v411 = vpop.f32.mrb[0].mxu0
    %v412 = vadd.f32 %v343, %v411
    %v413 = vpop.f32.mrb[0].mxu0
    %414 = vmatprep.mubr.f32.mxu0 0.0
    %415 = vmatmul.mubr.f32.gmra.mrb[0].mxu0 %v321
    %v416 = vpop.f32.mrb[0].mxu0
    %v417 = vadd.f32 %v343, %v416
    %v418 = vpop.f32.mrb[0].mxu0
    %419 = vdwg.mxu0
    %v420 = vmax.f32 %v412, 0.0
    %v421 = vmax.f32 %v417, 0.0
    %v422 = vld [vmem:[#allocation8] sm:$0xff]
    %v423 = vld [vmem:[#allocation8 + $0x8] sm:$0xff]
    %v424 = vld [vmem:[#allocation8 + $0x10] sm:$0xff]
    %v425 = vld [vmem:[#allocation8 + $0x18] sm:$0xff]
    %v426 = vld [vmem:[#allocation8 + $0x20] sm:$0xff]
    %v427 = vld [vmem:[#allocation8 + $0x28] sm:$0xff]
    %v428 = vld [vmem:[#allocation8 + $0x30] sm:$0xff]
    %v429 = vld [vmem:[#allocation8 + $0x38] sm:$0xff]
    %v430 = vld [vmem:[#allocation8 + $0x40] sm:$0xff]
    %v431 = vld [vmem:[#allocation8 + $0x48] sm:$0xff]
    %v432 = vld [vmem:[#allocation8 + $0x50] sm:$0xff]
    %v433 = vld [vmem:[#allocation8 + $0x58] sm:$0xff]
    %v434 = vld [vmem:[#allocation8 + $0x60] sm:$0xff]
    %v435 = vld [vmem:[#allocation8 + $0x68] sm:$0xff]
    %v436 = vld [vmem:[#allocation8 + $0x70] sm:$0xff]
    %v437 = vld [vmem:[#allocation8 + $0x78] sm:$0xff]
    %v438 = vld [vmem:[%s9] sm:$0x1]
    %v440 = vlaneseq
    %v441 = vshrl.u32 %v440, 7
    %v442 = vsub.s32 0, %v441
    %v443 = vrot.slane %v438, %v442
    %445 = vmatprep.subr.mxu0 0.0
    %446 = vmatpush1.msra.mxu0 %v422
    %447 = vmatprep.subr.mxu0 0.0
    %448 = vmatpush1.msra.mxu0 %v423
    %449 = vmatprep.subr.mxu0 0.0
    %450 = vmatpush1.msra.mxu0 %v424
    %451 = vmatprep.subr.mxu0 0.0
    %452 = vmatpush1.msra.mxu0 %v425
    %453 = vmatprep.subr.mxu0 0.0
    %454 = vmatpush1.msra.mxu0 %v426
    %455 = vmatprep.subr.mxu0 0.0
    %456 = vmatpush1.msra.mxu0 %v427
    %457 = vmatprep.subr.mxu0 0.0
    %458 = vmatpush1.msra.mxu0 %v428
    %459 = vmatprep.subr.mxu0 0.0
    %460 = vmatpush1.msra.mxu0 %v429
    %461 = vmatprep.subr.mxu0 0.0
    %462 = vmatpush1.msra.mxu0 %v430
    %463 = vmatprep.subr.mxu0 0.0
    %464 = vmatpush1.msra.mxu0 %v431
    %465 = vmatprep.subr.mxu0 0.0
    %466 = vmatpush1.msra.mxu0 %v432
    %467 = vmatprep.subr.mxu0 0.0
    %468 = vmatpush1.msra.mxu0 %v433
    %469 = vmatprep.subr.mxu0 0.0
    %470 = vmatpush1.msra.mxu0 %v434
    %471 = vmatprep.subr.mxu0 0.0
    %472 = vmatpush1.msra.mxu0 %v435
    %473 = vmatprep.subr.mxu0 0.0
    %474 = vmatpush1.msra.mxu0 %v436
    %475 = vmatprep.subr.mxu0 0.0
    %476 = vmatpush1.msra.mxu0 %v437
    %477 = vmatprep.subr.mxu0 0.0
    %478 = vmatpush1.msra.mxu0 0.0
    %479 = vmatprep.subr.mxu0 0.0
    %480 = vmatpush1.msra.mxu0 0.0
    %481 = vmatprep.subr.mxu0 0.0
    %482 = vmatpush1.msra.mxu0 0.0
    %483 = vmatprep.subr.mxu0 0.0
    %484 = vmatpush1.msra.mxu0 0.0
    %485 = vmatprep.subr.mxu0 0.0
    %486 = vmatpush1.msra.mxu0 0.0
    %487 = vmatprep.subr.mxu0 0.0
    %488 = vmatpush1.msra.mxu0 0.0
    %489 = vmatprep.subr.mxu0 0.0
    %490 = vmatpush1.msra.mxu0 0.0
    %491 = vmatprep.subr.mxu0 0.0
    %492 = vmatpush1.msra.mxu0 0.0
    %493 = vmatprep.subr.mxu0 0.0
    %494 = vmatpush1.msra.mxu0 0.0
    %495 = vmatprep.subr.mxu0 0.0
    %496 = vmatpush1.msra.mxu0 0.0
    %497 = vmatprep.subr.mxu0 0.0
    %498 = vmatpush1.msra.mxu0 0.0
    %499 = vmatprep.subr.mxu0 0.0
    %500 = vmatpush1.msra.mxu0 0.0
    %501 = vmatprep.subr.mxu0 0.0
    %502 = vmatpush1.msra.mxu0 0.0
    %503 = vmatprep.subr.mxu0 0.0
    %504 = vmatpush1.msra.mxu0 0.0
    %505 = vmatprep.subr.mxu0 0.0
    %506 = vmatpush1.msra.mxu0 0.0
    %507 = vmatprep.subr.mxu0 0.0
    %508 = vmatpush1.msra.mxu0 0.0
    %509 = vmatprep.mubr.f32.mxu0 0.0
    %510 = vmatmul.mubr.f32.gmra.mrb[0].mxu0 %v420
    %v511 = vpop.f32.mrb[0].mxu0
    %v512 = vadd.f32 %v443, %v511
    %v513 = vpop.f32.mrb[0].mxu0
    %514 = vmatprep.mubr.f32.mxu0 0.0
    %515 = vmatmul.mubr.f32.gmra.mrb[0].mxu0 %v421
    %v516 = vpop.f32.mrb[0].mxu0
    %v517 = vadd.f32 %v443, %v516
    %v518 = vpop.f32.mrb[0].mxu0
    %519 = vdwg.mxu0
    %v520 = vxor.u32 %v512, 2147483648
    %v521 = vxor.u32 %v517, 2147483648
    %v522 = vmul.f32 %v520, 1.442695
    %v523 = vpow.pop %v522
    %v524 = vmul.f32 %v521, 1.442695
    %v525 = vpow.pop %v524
    %v526 = vadd.f32 %v523, 1.0
    %v527 = vadd.f32 %v525, 1.0
    %v528 = vrcp.pop %v526
    %v529 = vmul.f32 1.0, %v528
    %v530 = vrcp.pop %v527
    %v531 = vmul.f32 1.0, %v530
    %532 = vst [vmem:[#allocation10] sm:$0xff] %v529
    %533 = vst [vmem:[#allocation10 + $0x8] sm:$0xff] %v531
    %534 = vst [vmem:[%s11] sm:$0xff] %v306
    %535 = vst [vmem:[%s11 + $0x8] sm:$0xff] %v308
    %536 = vst [vmem:[%s11 + $0x10] sm:$0xff] %v312
    %537 = vst [vmem:[%s11 + $0x18] sm:$0xff] %v314
    // Predicated region
    $region58: #{forward.1} parent=1 // pred_check
      _
    $region59: #{forward.1} parent=1 // pred_check_branch
      %539 = sbr.rel (0) target = $region61
    $region60: #{forward.1} parent=1 // pred_region
      %s541 = ssub.s32 256, 256
      %542 = vsyncadd [#allocation4], %s541
      %s543 = sshll.u32 [#allocation10], 4
      %s544 = int_to_ptr.vmem [resolvable:$true] %s543
      %549 = dma.vmem_to_hbm [thread:$0]  %s544, 256, %s10, [#allocation4], 128, 128, 8
    $region61: #{forward.1} parent=1 // pred_fallthru
      _
    // Predicated region
    $region62: #{forward.1} parent=1 // pred_check
      _
    $region63: #{forward.1} parent=1 // pred_check_branch
      %551 = sbr.rel (0) target = $region65
    $region64: #{forward.1} parent=1 // pred_region
      _
    $region65: #{forward.1} parent=1 // pred_fallthru
      _
    // Predicated region
    $region66: #{forward.1} parent=1 // pred_check
      _
    $region67: #{forward.1} parent=1 // pred_check_branch
      %553 = sbr.rel (0) target = $region69
    $region68: #{forward.1} parent=1 // pred_region
      %554 = dma.done [#allocation4], 256
    $region69: #{forward.1} parent=1 // pred_fallthru
      _
    // Predicated region
    $region70: #{forward.1} parent=1 // pred_check
      _
    $region71: #{forward.1} parent=1 // pred_check_branch
      %556 = sbr.rel (0) target = $region73
    $region72: #{forward.1} parent=1 // pred_region
      _
    $region73: #{forward.1} parent=1 // pred_fallthru
      _
    %557 = vsyncpa [#allocation3], 1
    %558 = vsyncpa [#allocation6], 1
    %559 = vsyncpa [#allocation9], 1
    %560 = vsyncpa [#allocation4], 1

</llo_original>
